<compile_context>
chip_gen: v7x
topology: tpu7x:2x2x1
jax: 0.10.0
libtpu: 0.0.40
codegen_flags: <defaults>
</compile_context>

<pallas_src>
import jax
import jax.numpy as jnp
from jax.experimental import pallas as pl
from jax.experimental.pallas import tpu as pltpu


def _round_up(x, m):
    return ((x + m - 1) // m) * m


def _pick_pack_factor(batch, n_features):
    """Largest row-packing factor P such that
      (a) P * n_features is a multiple of the 128-lane vreg width, and
      (b) P divides the batch, so x.reshape(B//P, P*F) is a free contiguous
          view (no HBM copy of x).
    Falls back to 1 (un-packed, lane-sparse but correct)."""
    for p in (8, 4, 2):
        if (n_features * p) % 128 == 0 and batch % p == 0:
            return p
    return 1


def _make_bnn_kernel(pack):
    def kernel(x_ref, w1_ref, b1_ref, w2_ref, b2_ref, o_ref):
        # fc1: [TB, P*F] @ [P*F, P*H] on the MXU (f32 accumulation), bias + ReLU on VPU.
        h = jnp.dot(x_ref[...], w1_ref[...], preferred_element_type=jnp.float32)
        h = jnp.maximum(h + b1_ref[...], 0.0)
        if pack == 1:
            # out_features == 1: broadcast multiply (VPU) + lane reduction (XLU)
            # instead of pushing a 1-column result through the MXU.
            y = jnp.sum(h * w2_ref[...], axis=-1, keepdims=True)
        else:
            # Block-diagonal fc2: [TB, P*H] @ [P*H, P] -> one output lane per packed row.
            y = jnp.dot(h, w2_ref[...], preferred_element_type=jnp.float32)
        o_ref[...] = (y + b2_ref[0, 0]).astype(o_ref.dtype)

    return kernel


def _bnn_pallas_call(x2d, w1, b1_row, w2, b2_smem, pack, block_rows):
    """x2d: [rows, feat] (rows may be P-packed); returns [rows, pack]."""
    rows, feat = x2d.shape
    out_cols = pack if pack > 1 else 1
    # Row tile (in packed rows): multiple of 8 (sublane constraint).  No padding
    # of x: grid = cdiv(rows, tile); Pallas masks the boundary block.
    tile = min(_round_up(max(block_rows // pack, 8), 8), _round_up(rows, 8))
    grid = (pl.cdiv(rows, tile),)

    return pl.pallas_call(
        _make_bnn_kernel(pack),
        out_shape=jax.ShapeDtypeStruct((rows, out_cols), jnp.float32),
        grid=grid,
        in_specs=[
            pl.BlockSpec((tile, feat), lambda i: (i, 0)),        # x: one row tile / step
            pl.BlockSpec(w1.shape, lambda i: (0, 0)),            # fc1 weight: VMEM-resident
            pl.BlockSpec(b1_row.shape, lambda i: (0, 0)),        # fc1 bias: resident
            pl.BlockSpec(w2.shape, lambda i: (0, 0)),            # fc2 weight: resident
            pl.BlockSpec(memory_space=pltpu.MemorySpace.SMEM),   # fc2 bias scalar in SMEM
        ],
        out_specs=pl.BlockSpec((tile, out_cols), lambda i: (i, 0)),
        compiler_params=pltpu.CompilerParams(
            # Batch tiles are independent -> v7x can shard the grid over both TCs.
            dimension_semantics=("parallel",),
        ),
    )(x2d, w1, b1_row, w2, b2_smem)


def bnn_forward(x, W1, b1, W2, b2, *, block_rows=16384):
    """BNN forward with already-sampled BayesLinear weights (torch layouts).

    x: [B, F] f32;  W1: [H, F], b1: [H];  W2: [1, H], b2: [1].
    Returns y: [B, 1] f32 = relu(x @ W1.T + b1) @ W2.T + b2.

    block_rows: rows of x per grid step.  Default 16384 (~2 MiB x-block at F=32)
    amortizes the ~0.35us/step overhead; raise toward 32K on v7x.
    """
    B, F = x.shape
    H = W1.shape[0]

    x = x.astype(jnp.float32)
    w1 = W1.T.astype(jnp.float32)                    # [F, H]
    b1_row = b1.reshape(1, H).astype(jnp.float32)    # [1, H]
    b2_smem = b2.reshape(1, 1).astype(jnp.float32)   # scalar -> SMEM

    pack = _pick_pack_factor(B, F)
    if pack == 1:
        # Lane-sparse fallback (still correct) when no packing factor divides B.
        w2_row = W2.reshape(1, H).astype(jnp.float32)
        return _bnn_pallas_call(x, w1, b1_row, w2_row, b2_smem, 1, block_rows)

    # Lane-dense path: fold `pack` batch rows into one lane-row.
    #   x:  [B, F]              -> [B/P, P*F]   (free contiguous reshape, no copy)
    #   W1: blockdiag_P([F, H]) -> [P*F, P*H]
    #   W2: blockdiag_P([H, 1]) -> [P*H, P]
    #   y:  [B/P, P]            -> [B, 1]       (free contiguous reshape)
    eye = jnp.eye(pack, dtype=jnp.float32)
    w1_bd = jnp.einsum("pq,fh->pfqh", eye, w1).reshape(pack * F, pack * H)
    w2_col = W2.reshape(H, 1).astype(jnp.float32)
    w2_bd = jnp.einsum("pq,ho->phqo", eye, w2_col).reshape(pack * H, pack)
    b1_t = jnp.tile(b1_row, (1, pack))               # [1, P*H]
    x_p = x.reshape(B // pack, pack * F)

    y = _bnn_pallas_call(x_p, w1_bd, b1_t, w2_bd, b2_smem, pack, block_rows)
    return y.reshape(B, 1)


def sample_bayes_linear(key, in_features, out_features):
    """Deterministic reparameterized sample of a BayesLinear layer.

    Returns (W, b) in torch layout: W [out_features, in_features], b [out_features],
    with W = W_mu + exp(W_log_sigma) * eps (and likewise for b).
    """
    # TODO(synk): for true per-call Bayesian MC sampling, fuse mu + exp(log_sigma)*eps
    # (pltpu.prng_seed / prng_random_bits + EUP exp) into the kernel under
    # pl.when(pl.program_id(0) == 0); here weights are sampled once with a fixed key,
    # matching a single stochastic forward pass.
    k_mu_w, k_ls_w, k_eps_w, k_mu_b, k_ls_b, k_eps_b = jax.random.split(key, 6)
    shape_w = (out_features, in_features)
    w_mu = jax.random.normal(k_mu_w, shape_w, jnp.float32) * 0.1
    w_log_sigma = jnp.full(shape_w, -5.0, jnp.float32) \
        + 0.01 * jax.random.normal(k_ls_w, shape_w, jnp.float32)
    w_eps = jax.random.normal(k_eps_w, shape_w, jnp.float32)
    W = w_mu + jnp.exp(w_log_sigma) * w_eps

    b_mu = jax.random.normal(k_mu_b, (out_features,), jnp.float32) * 0.1
    b_log_sigma = jnp.full((out_features,), -5.0, jnp.float32) \
        + 0.01 * jax.random.normal(k_ls_b, (out_features,), jnp.float32)
    b_eps = jax.random.normal(k_eps_b, (out_features,), jnp.float32)
    b = b_mu + jnp.exp(b_log_sigma) * b_eps
    return W, b


if __name__ == "__main__":
    key = jax.random.PRNGKey(0)
    k_x, k_fc1, k_fc2 = jax.random.split(key, 3)

    n_features = 32
    hidden = n_features // 2           # fc1.out_features
    batch = 100                        # divisible by P=4, not by 8*P -> boundary block exercised

    x = jax.random.normal(k_x, (batch, n_features), jnp.float32)
    W1, b1 = sample_bayes_linear(k_fc1, n_features, hidden)   # [16, 32], [16]
    W2, b2 = sample_bayes_linear(k_fc2, hidden, 1)            # [1, 16],  [1]

    # Condition test inputs to bf16-representable values so the kernel/reference
    # comparison is insensitive to how many bf16 passes each f32 MXU matmul uses.
    snap = lambda a: a.astype(jnp.bfloat16).astype(jnp.float32)
    x, W1, W2 = snap(x), snap(W1), snap(W2)

    # Small block_rows so this tiny demo exercises the multi-step grid, the
    # resident-weight index_maps and the boundary-masked tail block; production
    # callers keep the default (16384 rows/step).
    y = bnn_forward(x, W1, b1, W2, b2, block_rows=32)
    y = jax.block_until_ready(y)

    # Pure-JAX reference (same math as the PyTorch module with sampled params).
    hp = jax.lax.Precision.HIGHEST
    h_ref = jnp.maximum(jnp.dot(x, W1.T, precision=hp) + b1, 0.0)
    y_ref = jnp.dot(h_ref, W2.T, precision=hp) + b2
    assert y.shape == (batch, 1)
    max_err = float(jnp.max(jnp.abs(y - y_ref)))
    assert jnp.allclose(y, y_ref, atol=1e-3, rtol=1e-3), f"max abs err {max_err}"

    print("KERNEL_OK")
</pallas_src>

<mosaic_0001>
module attributes {stable_mosaic.version = 11 : i64} {
  func.func @kernel(%arg0: i32, %arg1: memref<8x128xf32, #tpu.memory_space<vmem>>, %arg2: memref<128x64xf32, #tpu.memory_space<vmem>>, %arg3: memref<1x64xf32, #tpu.memory_space<vmem>>, %arg4: memref<64x4xf32, #tpu.memory_space<vmem>>, %arg5: memref<1x1xf32, #tpu.memory_space<smem>>, %arg6: memref<8x4xf32, #tpu.memory_space<vmem>>) attributes {dimension_semantics = [#tpu.dimension_semantics<parallel>], iteration_bounds = array<i64: 4>, scalar_prefetch = 0 : i64, scratch_operands = 0 : i64, tpu.core_type = #tpu.core_type<tc>, window_params = [{transform_indices = @transform_0, window_bounds = array<i64: 8, 128>}, {pipeline_mode = #tpu.pipeline_mode<synchronous>, transform_indices = @transform_1, window_bounds = array<i64: 128, 64>}, {pipeline_mode = #tpu.pipeline_mode<synchronous>, transform_indices = @transform_2, window_bounds = array<i64: 1, 64>}, {pipeline_mode = #tpu.pipeline_mode<synchronous>, transform_indices = @transform_3, window_bounds = array<i64: 64, 4>}, {transform_indices = @transform_4, window_bounds = array<i64: 1, 1>}, {transform_indices = @transform_5, window_bounds = array<i64: 8, 4>}]} {
    %c0 = arith.constant 0 : index
    %c0_0 = arith.constant 0 : index
    %0 = vector.load %arg1[%c0, %c0_0] : memref<8x128xf32, #tpu.memory_space<vmem>>, vector<8x128xf32>
    %c0_1 = arith.constant 0 : index
    %c0_2 = arith.constant 0 : index
    %1 = vector.load %arg2[%c0_1, %c0_2] : memref<128x64xf32, #tpu.memory_space<vmem>>, vector<128x64xf32>
    %cst = arith.constant dense<0.000000e+00> : vector<8x64xf32>
    %2 = tpu.matmul %0, %1, %cst {dimension_numbers = #tpu.dot_dimension_numbers<[1], [0], [0], [1], [0, 0, 1, 1], [], []>} : vector<8x128xf32>, vector<128x64xf32>, vector<8x64xf32> -> vector<8x64xf32>
    %c0_3 = arith.constant 0 : index
    %c0_4 = arith.constant 0 : index
    %3 = vector.load %arg3[%c0_3, %c0_4] : memref<1x64xf32, #tpu.memory_space<vmem>>, vector<1x64xf32>
    %4 = vector.broadcast %3 : vector<1x64xf32> to vector<8x64xf32>
    %5 = arith.addf %2, %4 : vector<8x64xf32>
    %cst_5 = arith.constant 0.000000e+00 : f32
    %6 = vector.broadcast %cst_5 : f32 to vector<8x64xf32>
    %7 = arith.maximumf %5, %6 : vector<8x64xf32>
    %c0_6 = arith.constant 0 : index
    %c0_7 = arith.constant 0 : index
    %8 = vector.load %arg4[%c0_6, %c0_7] : memref<64x4xf32, #tpu.memory_space<vmem>>, vector<64x4xf32>
    %cst_8 = arith.constant dense<0.000000e+00> : vector<8x4xf32>
    %9 = tpu.matmul %7, %8, %cst_8 {dimension_numbers = #tpu.dot_dimension_numbers<[1], [0], [0], [1], [0, 0, 1, 1], [], []>} : vector<8x64xf32>, vector<64x4xf32>, vector<8x4xf32> -> vector<8x4xf32>
    %c0_9 = arith.constant 0 : index
    %c0_10 = arith.constant 0 : index
    %10 = memref.load %arg5[%c0_9, %c0_10] : memref<1x1xf32, #tpu.memory_space<smem>>
    %11 = vector.broadcast %10 : f32 to vector<8x4xf32>
    %12 = arith.addf %9, %11 : vector<8x4xf32>
    %c0_11 = arith.constant 0 : index
    %c0_12 = arith.constant 0 : index
    %13 = vector.load %arg6[%c0_11, %c0_12] : memref<8x4xf32, #tpu.memory_space<vmem>>, vector<8x4xf32>
    tpu.vector_store %arg6[%c0_11, %c0_12], %12 {strides = array<i32>} : memref<8x4xf32, #tpu.memory_space<vmem>>, vector<8x4xf32>,
    return
  }
  func.func @transform_0(%arg0: i32) -> (i32, i32) {
    %c0_i32 = arith.constant 0 : i32
    %c0_i32_0 = arith.constant 0 : i32
    return %arg0, %c0_i32 : i32, i32
  }
  func.func @transform_1(%arg0: i32) -> (i32, i32) {
    %c0_i32 = arith.constant 0 : i32
    %c0_i32_0 = arith.constant 0 : i32
    %c0_i32_1 = arith.constant 0 : i32
    return %c0_i32, %c0_i32_0 : i32, i32
  }
  func.func @transform_2(%arg0: i32) -> (i32, i32) {
    %c0_i32 = arith.constant 0 : i32
    %c0_i32_0 = arith.constant 0 : i32
    %c0_i32_1 = arith.constant 0 : i32
    return %c0_i32, %c0_i32_0 : i32, i32
  }
  func.func @transform_3(%arg0: i32) -> (i32, i32) {
    %c0_i32 = arith.constant 0 : i32
    %c0_i32_0 = arith.constant 0 : i32
    %c0_i32_1 = arith.constant 0 : i32
    return %c0_i32, %c0_i32_0 : i32, i32
  }
  func.func @transform_4(%arg0: i32) -> (i32, i32) {
    %c0_i32 = arith.constant 0 : i32
    %c0_i32_0 = arith.constant 0 : i32
    %c0_i32_1 = arith.constant 0 : i32
    return %c0_i32, %c0_i32_0 : i32, i32
  }
  func.func @transform_5(%arg0: i32) -> (i32, i32) {
    %c0_i32 = arith.constant 0 : i32
    %c0_i32_0 = arith.constant 0 : i32
    return %arg0, %c0_i32 : i32, i32
  }
}

</mosaic_0001>

<llo_original>
// kernel: tpu_custom_call.1
$region0: #{tpu_custom_call.1}
  #allocation0 [shape = 'u32[]', space=smem, size = 0x4, offset = 0x4, fixed_abs, tag = 'smem constant byte address 0x4 - core index']
  #allocation1 [shape = 'u32[144,128]{1,0:T(1,128)}', space=vmem, size = 0x12000, scoped, tag = 'internal scratch']
  #allocation2 [shape = 'f32[1,1]{1,0:T(1,128)S(6)}', space=smem, size = 0x200, scoped, tag = 'scoped memory for tpu_custom_call.1']
  %s0 = inlined_call_operand.vmem [shape: f32[25,128], index: 0, kind: input, shape index: {}]
  %s1 = inlined_call_operand.vmem [shape: f32[128,64], index: 1, kind: input, shape index: {}]
  %s2 = inlined_call_operand.vmem [shape: f32[1,64], index: 2, kind: input, shape index: {}]
  %s3 = inlined_call_operand.vmem [shape: f32[64,4], index: 3, kind: input, shape index: {}]
  %s4 = inlined_call_operand.<no memory space> [shape: f32[1,1], index: 4, kind: input, shape index: {}]
  %s5 = inlined_call_operand.vmem [shape: f32[25,4], index: 5, kind: output, shape index: {}]
  %s6 = sld [smem:[#allocation0]]
  $region53: #{tpu_custom_call.1} parent=0
    _
  %s8 = ssub.s32 1, %s6
  %s9 = scalar_select 0, %s8, %s6
  %10 = sst [smem:[#allocation2]] %s4
  loop: start=0, step=1, limit=6
  $region2: #{tpu_custom_call.1} parent=0 // loop_pre_header
    _
  $region3: #{tpu_custom_call.1} parent=0 // loop_header
    %s12 = sphi 0, %s16
    %p13 = scmp.ge.s32.totalorder %s12, 6
    %s22 = sphi 0, %s24
    %s25 = sphi 0, %s22
    %s26 = sphi 0, %s25
    %s42 = sphi 0, %s26
    %s46 = sphi 0, %s46
    %s48 = sphi 0, %s46
    %s49 = sphi 0, %s48
    %s63 = sphi 0, %s49
    %s67 = sphi 0, %s67
    %s69 = sphi 0, %s67
    %s70 = sphi 0, %s69
    %s84 = sphi 0, %s70
    %s88 = sphi 0, %s88
    %s90 = sphi 0, %s88
    %s91 = sphi 0, %s90
    %s105 = sphi 0, %s91
    %s109 = sphi 0, %s109
    %s111 = sphi 0, %s109
    %s112 = sphi 0, %s111
    %s126 = sphi 0, %s112
    %s132 = sphi 0, %s134
    %s135 = sphi 0, %s132
    %s136 = sphi 0, %s135
    %s152 = sphi 0, %s136
  $region4: #{tpu_custom_call.1} parent=0 // loop_header_branch
    %15 = sbr.rel (%p13) target = $region8
  $region5: #{tpu_custom_call.1} parent=0 // loop_body
    %s17 = ssub.s32 %s12, 1
    %s18 = ssub.s32 %s12, 2
    %s19 = sadd.s32 %s12, 1
    %s20 = ssub.s32 %s12, %s19
    %p21 = scmp.eq.s32.totalorder %s20, 0
    %s23 = sadd.s32 %s22, 1
    %s24 = scalar_select %p21, %s22, %s23
    %p27 = pneg %p21
    %p28 = scmp.eq.s32.totalorder %s12, 3
    %p29 = por %p27, %p28
    %p30 = scmp.ne.s32.totalorder %s22, %s25
    %p31 = scmp.eq.s32.totalorder %s12, 0
    %p32 = por %p30, %p31
    %p33 = scmp.ne.s32.totalorder %s22, %s25
    %p34 = scmp.eq.s32.totalorder %s17, 3
    %p35 = por %p33, %p34
    %p36 = scmp.ne.s32.totalorder %s25, %s26
    %p37 = scmp.eq.s32.totalorder %s17, 0
    %p38 = por %p36, %p37
    %p39 = scmp.ne.s32.totalorder %s25, %s26
    %p40 = scmp.eq.s32.totalorder %s18, 3
    %p41 = por %p39, %p40
    %p43 = scmp.ne.s32.totalorder %s26, %s42
    %p44 = scmp.eq.s32.totalorder %s18, 0
    %p45 = por %p43, %p44
    %s47 = sadd.s32 %s46, 1
    %p50 = scmp.eq.s32.totalorder %s12, 3
    %p51 = scmp.ne.s32.totalorder %s46, %s48
    %p52 = scmp.eq.s32.totalorder %s12, 0
    %p53 = por %p51, %p52
    %p54 = scmp.ne.s32.totalorder %s46, %s48
    %p55 = scmp.eq.s32.totalorder %s17, 3
    %p56 = por %p54, %p55
    %p57 = scmp.ne.s32.totalorder %s48, %s49
    %p58 = scmp.eq.s32.totalorder %s17, 0
    %p59 = por %p57, %p58
    %p60 = scmp.ne.s32.totalorder %s48, %s49
    %p61 = scmp.eq.s32.totalorder %s18, 3
    %p62 = por %p60, %p61
    %p64 = scmp.ne.s32.totalorder %s49, %s63
    %p65 = scmp.eq.s32.totalorder %s18, 0
    %p66 = por %p64, %p65
    %s68 = sadd.s32 %s67, 1
    %p71 = scmp.eq.s32.totalorder %s12, 3
    %p72 = scmp.ne.s32.totalorder %s67, %s69
    %p73 = scmp.eq.s32.totalorder %s12, 0
    %p74 = por %p72, %p73
    %p75 = scmp.ne.s32.totalorder %s67, %s69
    %p76 = scmp.eq.s32.totalorder %s17, 3
    %p77 = por %p75, %p76
    %p78 = scmp.ne.s32.totalorder %s69, %s70
    %p79 = scmp.eq.s32.totalorder %s17, 0
    %p80 = por %p78, %p79
    %p81 = scmp.ne.s32.totalorder %s69, %s70
    %p82 = scmp.eq.s32.totalorder %s18, 3
    %p83 = por %p81, %p82
    %p85 = scmp.ne.s32.totalorder %s70, %s84
    %p86 = scmp.eq.s32.totalorder %s18, 0
    %p87 = por %p85, %p86
    %s89 = sadd.s32 %s88, 1
    %p92 = scmp.eq.s32.totalorder %s12, 3
    %p93 = scmp.ne.s32.totalorder %s88, %s90
    %p94 = scmp.eq.s32.totalorder %s12, 0
    %p95 = por %p93, %p94
    %p96 = scmp.ne.s32.totalorder %s88, %s90
    %p97 = scmp.eq.s32.totalorder %s17, 3
    %p98 = por %p96, %p97
    %p99 = scmp.ne.s32.totalorder %s90, %s91
    %p100 = scmp.eq.s32.totalorder %s17, 0
    %p101 = por %p99, %p100
    %p102 = scmp.ne.s32.totalorder %s90, %s91
    %p103 = scmp.eq.s32.totalorder %s18, 3
    %p104 = por %p102, %p103
    %p106 = scmp.ne.s32.totalorder %s91, %s105
    %p107 = scmp.eq.s32.totalorder %s18, 0
    %p108 = por %p106, %p107
    %s110 = sadd.s32 %s109, 1
    %p113 = scmp.eq.s32.totalorder %s12, 3
    %p114 = scmp.ne.s32.totalorder %s109, %s111
    %p115 = scmp.eq.s32.totalorder %s12, 0
    %p116 = por %p114, %p115
    %p117 = scmp.ne.s32.totalorder %s109, %s111
    %p118 = scmp.eq.s32.totalorder %s17, 3
    %p119 = por %p117, %p118
    %p120 = scmp.ne.s32.totalorder %s111, %s112
    %p121 = scmp.eq.s32.totalorder %s17, 0
    %p122 = por %p120, %p121
    %p123 = scmp.ne.s32.totalorder %s111, %s112
    %p124 = scmp.eq.s32.totalorder %s18, 3
    %p125 = por %p123, %p124
    %p127 = scmp.ne.s32.totalorder %s112, %s126
    %p128 = scmp.eq.s32.totalorder %s18, 0
    %p129 = por %p127, %p128
    %s130 = ssub.s32 %s12, %s19
    %p131 = scmp.eq.s32.totalorder %s130, 0
    %s133 = sadd.s32 %s132, 1
    %s134 = scalar_select %p131, %s132, %s133
    %p137 = pneg %p131
    %p138 = scmp.eq.s32.totalorder %s12, 3
    %p139 = por %p137, %p138
    %p140 = scmp.ne.s32.totalorder %s132, %s135
    %p141 = scmp.eq.s32.totalorder %s12, 0
    %p142 = por %p140, %p141
    %p143 = scmp.ne.s32.totalorder %s132, %s135
    %p144 = scmp.eq.s32.totalorder %s17, 3
    %p145 = por %p143, %p144
    %p146 = scmp.ne.s32.totalorder %s135, %s136
    %p147 = scmp.eq.s32.totalorder %s17, 0
    %p148 = por %p146, %p147
    %p149 = scmp.ne.s32.totalorder %s135, %s136
    %p150 = scmp.eq.s32.totalorder %s18, 3
    %p151 = por %p149, %p150
    %p153 = scmp.ne.s32.totalorder %s136, %s152
    %p154 = scmp.eq.s32.totalorder %s18, 0
    %p155 = por %p153, %p154
    %p156 = scmp.le.s32.totalorder 1, %s12
    %p157 = scmp.lt.s32.totalorder %s12, 5
    %p158 = pnand %p156, %p157
    %p159 = pneg %p158
    // Predicated region
    $region9: #{tpu_custom_call.1} parent=5 // pred_check
      _
    $region10: #{tpu_custom_call.1} parent=5 // pred_check_branch
      %161 = sbr.rel (%p158) target = $region12
    $region11: #{tpu_custom_call.1} parent=5 // pred_region
      %s162 = ssub.s32 %s12, 1
      // Predicated region
      $region13: #{tpu_custom_call.1} parent=11 // pred_check
        %p163 = pneg %p59
      $region14: #{tpu_custom_call.1} parent=11 // pred_check_branch
        %165 = sbr.rel (%p163) target = $region16
      $region15: #{tpu_custom_call.1} parent=11 // pred_region
        _
      $region16: #{tpu_custom_call.1} parent=11 // pred_fallthru
        _
      // Predicated region
      $region17: #{tpu_custom_call.1} parent=11 // pred_check
        %p166 = pneg %p80
      $region18: #{tpu_custom_call.1} parent=11 // pred_check_branch
        %168 = sbr.rel (%p166) target = $region20
      $region19: #{tpu_custom_call.1} parent=11 // pred_region
        _
      $region20: #{tpu_custom_call.1} parent=11 // pred_fallthru
        _
      // Predicated region
      $region21: #{tpu_custom_call.1} parent=11 // pred_check
        %p169 = pneg %p101
      $region22: #{tpu_custom_call.1} parent=11 // pred_check_branch
        %171 = sbr.rel (%p169) target = $region24
      $region23: #{tpu_custom_call.1} parent=11 // pred_region
        _
      $region24: #{tpu_custom_call.1} parent=11 // pred_fallthru
        _
      // Predicated region
      $region25: #{tpu_custom_call.1} parent=11 // pred_check
        %p172 = pneg %p122
      $region26: #{tpu_custom_call.1} parent=11 // pred_check_branch
        %174 = sbr.rel (%p172) target = $region28
      $region27: #{tpu_custom_call.1} parent=11 // pred_region
        _
      $region28: #{tpu_custom_call.1} parent=11 // pred_fallthru
        _
    $region12: #{tpu_custom_call.1} parent=5 // pred_fallthru
      _
    %p175 = scmp.lt.s32.totalorder %s12, 4
    // Predicated region
    $region29: #{tpu_custom_call.1} parent=5 // pred_check
      %p176 = pneg %p175
    $region30: #{tpu_custom_call.1} parent=5 // pred_check_branch
      %178 = sbr.rel (%p176) target = $region32
    $region31: #{tpu_custom_call.1} parent=5 // pred_region
      // Predicated region
      $region33: #{tpu_custom_call.1} parent=31 // pred_check
        %p179 = pneg %p32
      $region34: #{tpu_custom_call.1} parent=31 // pred_check_branch
        %181 = sbr.rel (%p179) target = $region36
      $region35: #{tpu_custom_call.1} parent=31 // pred_region
        %p182 = scmp.lt.s32.totalorder %s12, 3
        %s183 = scalar_select %p182, %s12, 3
        %s184 = smul.addr %s183, 8
        %s185 = scalar_lea.vmem %s0, %s184
      $region36: #{tpu_custom_call.1} parent=31 // pred_fallthru
        _
    $region32: #{tpu_custom_call.1} parent=5 // pred_fallthru
      _
    %p186 = scmp.le.s32.totalorder 1, %s12
    %p187 = scmp.lt.s32.totalorder %s12, 5
    %p188 = pnand %p186, %p187
    %p189 = pneg %p188
    // Predicated region
    $region37: #{tpu_custom_call.1} parent=5 // pred_check
      _
    $region38: #{tpu_custom_call.1} parent=5 // pred_check_branch
      %191 = sbr.rel (%p188) target = $region40
    $region39: #{tpu_custom_call.1} parent=5 // pred_region
      %s192 = ssub.s32 %s12, 1
      %p193 = scmp.lt.s32.totalorder %s17, 3
      %s194 = scalar_select %p193, %s17, 3
      %s195 = smul.addr %s194, 8
      %s196 = scalar_lea.vmem %s0, %s195
      %p197 = pneg %p38
      %p198 = pneg %p35
      %p199 = pneg %p59
      %p200 = pneg %p56
      %p201 = pneg %p80
      %p202 = pneg %p77
      %p203 = pneg %p101
      %p204 = pneg %p98
      %p205 = pneg %p122
      %p206 = pneg %p119
      %p207 = pneg %p148
      %p208 = pneg %p145
      %p209 = scmp.lt.s32.totalorder %s17, 3
      %s210 = scalar_select %p209, %s17, 3
      %s211 = smul.addr %s210, 8
      %s212 = scalar_lea.vmem %s5, %s211
      %p213 = scmp.lt.s32.totalorder %s17, 3
      %s214 = scalar_select %p213, %s17, 3
      %s215 = smul.addr %s214, 8
      %s216 = scalar_lea.vmem %s0, %s215
      %p217 = scmp.lt.s32.totalorder %s17, 3
      %s218 = scalar_select %p217, %s17, 3
      %s219 = smul.addr %s218, 8
      %s220 = scalar_lea.vmem %s5, %s219
      %v221 = vld [vmem:[%s216] sm:$0xff]
      %v222 = vld [vmem:[%s1] sm:$0xff]
      %v223 = vld [vmem:[%s1 + $0x8] sm:$0xff]
      %v224 = vld [vmem:[%s1 + $0x10] sm:$0xff]
      %v225 = vld [vmem:[%s1 + $0x18] sm:$0xff]
      %v226 = vld [vmem:[%s1 + $0x20] sm:$0xff]
      %v227 = vld [vmem:[%s1 + $0x28] sm:$0xff]
      %v228 = vld [vmem:[%s1 + $0x30] sm:$0xff]
      %v229 = vld [vmem:[%s1 + $0x38] sm:$0xff]
      %v230 = vld [vmem:[%s1 + $0x40] sm:$0xff]
      %v231 = vld [vmem:[%s1 + $0x48] sm:$0xff]
      %v232 = vld [vmem:[%s1 + $0x50] sm:$0xff]
      %v233 = vld [vmem:[%s1 + $0x58] sm:$0xff]
      %v234 = vld [vmem:[%s1 + $0x60] sm:$0xff]
      %v235 = vld [vmem:[%s1 + $0x68] sm:$0xff]
      %v236 = vld [vmem:[%s1 + $0x70] sm:$0xff]
      %v237 = vld [vmem:[%s1 + $0x78] sm:$0xff]
      %v238 = vld [vmem:[%s2] sm:$0x1]
      %v240 = vlaneseq
      %v241 = vshrl.u32 %v240, 7
      %v242 = vsub.s32 0, %v241
      %v243 = vrot.slane %v238, %v242
      %245 = vmatprep.subr.mxu0 0.0
      %246 = vmatpush1.msra.mxu0 %v222
      %247 = vmatprep.subr.mxu0 0.0
      %248 = vmatpush1.msra.mxu0 %v223
      %249 = vmatprep.subr.mxu0 0.0
      %250 = vmatpush1.msra.mxu0 %v224
      %251 = vmatprep.subr.mxu0 0.0
      %252 = vmatpush1.msra.mxu0 %v225
      %253 = vmatprep.subr.mxu0 0.0
      %254 = vmatpush1.msra.mxu0 %v226
      %255 = vmatprep.subr.mxu0 0.0
      %256 = vmatpush1.msra.mxu0 %v227
      %257 = vmatprep.subr.mxu0 0.0
      %258 = vmatpush1.msra.mxu0 %v228
      %259 = vmatprep.subr.mxu0 0.0
      %260 = vmatpush1.msra.mxu0 %v229
      %261 = vmatprep.subr.mxu0 0.0
      %262 = vmatpush1.msra.mxu0 %v230
      %263 = vmatprep.subr.mxu0 0.0
      %264 = vmatpush1.msra.mxu0 %v231
      %265 = vmatprep.subr.mxu0 0.0
      %266 = vmatpush1.msra.mxu0 %v232
      %267 = vmatprep.subr.mxu0 0.0
      %268 = vmatpush1.msra.mxu0 %v233
      %269 = vmatprep.subr.mxu0 0.0
      %270 = vmatpush1.msra.mxu0 %v234
      %271 = vmatprep.subr.mxu0 0.0
      %272 = vmatpush1.msra.mxu0 %v235
      %273 = vmatprep.subr.mxu0 0.0
      %274 = vmatpush1.msra.mxu0 %v236
      %275 = vmatprep.subr.mxu0 0.0
      %276 = vmatpush1.msra.mxu0 %v237
      %277 = vmatprep.subr.mxu0 0.0
      %278 = vmatpush1.msra.mxu0 0.0
      %279 = vmatprep.subr.mxu0 0.0
      %280 = vmatpush1.msra.mxu0 0.0
      %281 = vmatprep.subr.mxu0 0.0
      %282 = vmatpush1.msra.mxu0 0.0
      %283 = vmatprep.subr.mxu0 0.0
      %284 = vmatpush1.msra.mxu0 0.0
      %285 = vmatprep.subr.mxu0 0.0
      %286 = vmatpush1.msra.mxu0 0.0
      %287 = vmatprep.subr.mxu0 0.0
      %288 = vmatpush1.msra.mxu0 0.0
      %289 = vmatprep.subr.mxu0 0.0
      %290 = vmatpush1.msra.mxu0 0.0
      %291 = vmatprep.subr.mxu0 0.0
      %292 = vmatpush1.msra.mxu0 0.0
      %293 = vmatprep.subr.mxu0 0.0
      %294 = vmatpush1.msra.mxu0 0.0
      %295 = vmatprep.subr.mxu0 0.0
      %296 = vmatpush1.msra.mxu0 0.0
      %297 = vmatprep.subr.mxu0 0.0
      %298 = vmatpush1.msra.mxu0 0.0
      %299 = vmatprep.subr.mxu0 0.0
      %300 = vmatpush1.msra.mxu0 0.0
      %301 = vmatprep.subr.mxu0 0.0
      %302 = vmatpush1.msra.mxu0 0.0
      %303 = vmatprep.subr.mxu0 0.0
      %304 = vmatpush1.msra.mxu0 0.0
      %305 = vmatprep.subr.mxu0 0.0
      %306 = vmatpush1.msra.mxu0 0.0
      %307 = vmatprep.subr.mxu0 0.0
      %308 = vmatpush1.msra.mxu0 0.0
      %309 = vmatprep.mubr.f32.mxu0 0.0
      %310 = vmatmul.mubr.f32.gmra.mrb[0].mxu0 %v221
      %v311 = vpop.f32.mrb[0].mxu0
      %v312 = vadd.f32 %v243, %v311
      %v313 = vpop.f32.mrb[0].mxu0
      %314 = vdwg.mxu0
      %v315 = vmax.f32 %v312, 0.0
      %v316 = vld [vmem:[%s3] sm:$0xff]
      %v317 = vld [vmem:[%s3 + $0x8] sm:$0xff]
      %v318 = vld [vmem:[%s3 + $0x10] sm:$0xff]
      %v319 = vld [vmem:[%s3 + $0x18] sm:$0xff]
      %v320 = vld [vmem:[%s3 + $0x20] sm:$0xff]
      %v321 = vld [vmem:[%s3 + $0x28] sm:$0xff]
      %v322 = vld [vmem:[%s3 + $0x30] sm:$0xff]
      %v323 = vld [vmem:[%s3 + $0x38] sm:$0xff]
      %s324 = sld [smem:[#allocation2]]
      %v325 = vstv %s324
      %vm326 = vcmask 523264
      %v328 = vsel %vm326, %v315, 0
      %330 = vmatprep.subr.mxu0 0.0
      %331 = vmatpush1.msra.mxu0 %v316
      %332 = vmatprep.subr.mxu0 0.0
      %333 = vmatpush1.msra.mxu0 %v317
      %334 = vmatprep.subr.mxu0 0.0
      %335 = vmatpush1.msra.mxu0 %v318
      %336 = vmatprep.subr.mxu0 0.0
      %337 = vmatpush1.msra.mxu0 %v319
      %338 = vmatprep.subr.mxu0 0.0
      %339 = vmatpush1.msra.mxu0 %v320
      %340 = vmatprep.subr.mxu0 0.0
      %341 = vmatpush1.msra.mxu0 %v321
      %342 = vmatprep.subr.mxu0 0.0
      %343 = vmatpush1.msra.mxu0 %v322
      %344 = vmatprep.subr.mxu0 0.0
      %345 = vmatpush1.msra.mxu0 %v323
      %346 = vmatprep.subr.mxu0 0.0
      %347 = vmatpush1.msra.mxu0 0.0
      %348 = vmatprep.subr.mxu0 0.0
      %349 = vmatpush1.msra.mxu0 0.0
      %350 = vmatprep.subr.mxu0 0.0
      %351 = vmatpush1.msra.mxu0 0.0
      %352 = vmatprep.subr.mxu0 0.0
      %353 = vmatpush1.msra.mxu0 0.0
      %354 = vmatprep.subr.mxu0 0.0
      %355 = vmatpush1.msra.mxu0 0.0
      %356 = vmatprep.subr.mxu0 0.0
      %357 = vmatpush1.msra.mxu0 0.0
      %358 = vmatprep.subr.mxu0 0.0
      %359 = vmatpush1.msra.mxu0 0.0
      %360 = vmatprep.subr.mxu0 0.0
      %361 = vmatpush1.msra.mxu0 0.0
      %362 = vmatprep.subr.mxu0 0.0
      %363 = vmatpush1.msra.mxu0 0.0
      %364 = vmatprep.subr.mxu0 0.0
      %365 = vmatpush1.msra.mxu0 0.0
      %366 = vmatprep.subr.mxu0 0.0
      %367 = vmatpush1.msra.mxu0 0.0
      %368 = vmatprep.subr.mxu0 0.0
      %369 = vmatpush1.msra.mxu0 0.0
      %370 = vmatprep.subr.mxu0 0.0
      %371 = vmatpush1.msra.mxu0 0.0
      %372 = vmatprep.subr.mxu0 0.0
      %373 = vmatpush1.msra.mxu0 0.0
      %374 = vmatprep.subr.mxu0 0.0
      %375 = vmatpush1.msra.mxu0 0.0
      %376 = vmatprep.subr.mxu0 0.0
      %377 = vmatpush1.msra.mxu0 0.0
      %378 = vmatprep.subr.mxu0 0.0
      %379 = vmatpush1.msra.mxu0 0.0
      %380 = vmatprep.subr.mxu0 0.0
      %381 = vmatpush1.msra.mxu0 0.0
      %382 = vmatprep.subr.mxu0 0.0
      %383 = vmatpush1.msra.mxu0 0.0
      %384 = vmatprep.subr.mxu0 0.0
      %385 = vmatpush1.msra.mxu0 0.0
      %386 = vmatprep.subr.mxu0 0.0
      %387 = vmatpush1.msra.mxu0 0.0
      %388 = vmatprep.subr.mxu0 0.0
      %389 = vmatpush1.msra.mxu0 0.0
      %390 = vmatprep.subr.mxu0 0.0
      %391 = vmatpush1.msra.mxu0 0.0
      %392 = vmatprep.subr.mxu0 0.0
      %393 = vmatpush1.msra.mxu0 0.0
      %394 = vmatprep.mubr.f32.mxu0 0.0
      %395 = vmatmul.mubr.f32.gmra.mrb[0].mxu0 %v328
      %v396 = vpop.f32.mrb[0].mxu0
      %v397 = vadd.f32 %v325, %v396
      %v398 = vpop.f32.mrb[0].mxu0
      %399 = vdwg.mxu0
      %vm400 = vcmask 31744
      %401 = vst.msk [vmem:[%s220] sm:$0xff] %vm400, %v397
      %p402 = scmp.lt.s32.totalorder %s17, 3
      %s403 = scalar_select %p402, %s17, 3
      %s404 = smul.addr %s403, 8
      %s405 = scalar_lea.vmem %s5, %s404
      // Predicated region
      $region41: #{tpu_custom_call.1} parent=39 // pred_check
        %p406 = pneg %p145
      $region42: #{tpu_custom_call.1} parent=39 // pred_check_branch
        %408 = sbr.rel (%p406) target = $region44
      $region43: #{tpu_custom_call.1} parent=39 // pred_region
        _
      $region44: #{tpu_custom_call.1} parent=39 // pred_fallthru
        _
    $region40: #{tpu_custom_call.1} parent=5 // pred_fallthru
      _
    %p409 = scmp.le.s32.totalorder 2, %s12
    // Predicated region
    $region45: #{tpu_custom_call.1} parent=5 // pred_check
      %p410 = pneg %p409
    $region46: #{tpu_custom_call.1} parent=5 // pred_check_branch
      %412 = sbr.rel (%p410) target = $region48
    $region47: #{tpu_custom_call.1} parent=5 // pred_region
      %s413 = ssub.s32 %s12, 2
      // Predicated region
      $region49: #{tpu_custom_call.1} parent=47 // pred_check
        %p414 = pneg %p151
      $region50: #{tpu_custom_call.1} parent=47 // pred_check_branch
        %416 = sbr.rel (%p414) target = $region52
      $region51: #{tpu_custom_call.1} parent=47 // pred_region
        %p417 = scmp.lt.s32.totalorder %s18, 3
        %s418 = scalar_select %p417, %s18, 3
        %s419 = smul.addr %s418, 8
        %s420 = scalar_lea.vmem %s5, %s419
      $region52: #{tpu_custom_call.1} parent=47 // pred_fallthru
        _
    $region48: #{tpu_custom_call.1} parent=5 // pred_fallthru
      _
  $region6: #{tpu_custom_call.1} parent=0 // loop_footer
    %s16 = sadd.s32 1, %s12
  $region7: #{tpu_custom_call.1} parent=0 // loop_footer_branch
    %11 = sbr.rel target = $region3
  $region8: #{tpu_custom_call.1} parent=0 // loop_exit
    _

</llo_original>
